<compile_context>
chip_gen: v5e
topology: v5e:2x2
jax: 0.10.0
libtpu: 0.0.40
codegen_flags: <defaults>
</compile_context>

<pallas_src>
import jax
import jax.numpy as jnp
from jax.experimental import pallas as pl
from jax.experimental.pallas import tpu as pltpu


# ---------------------------------------------------------------------------
# Kernel
# ---------------------------------------------------------------------------
def _qfunc_kernel(obs_ref, act_ref,
                  w1o_ref, w1a_ref, w2_ref, w3_ref,
                  b_ref, out_ref):
    """One batch tile of the Q-function MLP (2 hidden ReLU layers + linear head)."""
    h1_dim = w1o_ref.shape[1]
    h2_dim = w2_ref.shape[1]
    out_dim = w3_ref.shape[1]
    cdt = w1o_ref.dtype                      # compute dtype for MXU inputs (bf16)

    b = b_ref[...]                           # (3, W) f32, lane-aligned rows
    b1 = b[0:1, :h1_dim]
    b2 = b[1:2, :h2_dim]
    b3 = b[2:3, :out_dim]

    # Layer 1: obs@W1_obs + act@W1_act  ==  concat([obs, act], -1) @ W1
    # (split matmul avoids the lane-axis concat / relayout inside the kernel).
    h1 = (jnp.dot(obs_ref[...].astype(cdt), w1o_ref[...],
                  preferred_element_type=jnp.float32)
          + jnp.dot(act_ref[...].astype(cdt), w1a_ref[...],
                    preferred_element_type=jnp.float32)
          + b1)
    h1 = jnp.maximum(h1, 0.0)

    # Layer 2
    h2 = jnp.dot(h1.astype(cdt), w2_ref[...],
                 preferred_element_type=jnp.float32) + b2
    h2 = jnp.maximum(h2, 0.0)

    # Output head (no activation).
    q = jnp.dot(h2.astype(cdt), w3_ref[...],
                preferred_element_type=jnp.float32) + b3
    out_ref[...] = q.astype(out_ref.dtype)


# ---------------------------------------------------------------------------
# Parameter preparation (done once, outside the per-call hot path)
# ---------------------------------------------------------------------------
def pack_params(params, obs_dim, compute_dtype=jnp.bfloat16):
    """Split W1 along its input axis and pack biases into one lane-aligned array."""
    (w1, b1), (w2, b2), (w3, b3) = params
    w1 = jnp.asarray(w1, compute_dtype)
    w1_obs, w1_act = w1[:obs_dim], w1[obs_dim:]
    w2 = jnp.asarray(w2, compute_dtype)
    w3 = jnp.asarray(w3, compute_dtype)

    widths = (b1.shape[0], b2.shape[0], b3.shape[0])
    pad_w = max(128, ((max(widths) + 127) // 128) * 128)

    def _pad(b):
        return jnp.pad(jnp.asarray(b, jnp.float32), (0, pad_w - b.shape[0]))

    b_pack = jnp.stack([_pad(b1), _pad(b2), _pad(b3)], axis=0)   # (3, pad_w) f32
    return (w1_obs, w1_act, w2, w3, b_pack)


# ---------------------------------------------------------------------------
# Forward wrapper
# ---------------------------------------------------------------------------
def mlp_qfunction(obs, act, packed, *, block_b=512):
    """Pallas wrapper reproducing MLPQFunction.forward(obs, act)."""
    w1_obs, w1_act, w2, w3, b_pack = packed
    batch, obs_dim = obs.shape
    act_dim = act.shape[1]
    out_dim = w3.shape[1]                     # == 1 for this module

    # Batch tile: whole batch if small, otherwise 512 rows (multiple of 8,
    # comfortably inside v7x's default scoped VMEM with double buffering).
    tb = batch if batch <= block_b else block_b
    padded_b = int(pl.cdiv(batch, tb)) * tb
    if padded_b != batch:
        pad = padded_b - batch
        obs = jnp.pad(obs, ((0, pad), (0, 0)))
        act = jnp.pad(act, ((0, pad), (0, 0)))
    grid = (padded_b // tb,)

    def resident(shape):                      # weights stay in VMEM across tiles
        return pl.BlockSpec(shape, lambda i: (0, 0))

    q = pl.pallas_call(
        _qfunc_kernel,
        out_shape=jax.ShapeDtypeStruct((padded_b, out_dim), jnp.float32),
        grid=grid,
        in_specs=[
            pl.BlockSpec((tb, obs_dim), lambda i: (i, 0)),
            pl.BlockSpec((tb, act_dim), lambda i: (i, 0)),
            resident(w1_obs.shape),
            resident(w1_act.shape),
            resident(w2.shape),
            resident(w3.shape),
            resident(b_pack.shape),
        ],
        out_specs=pl.BlockSpec((tb, out_dim), lambda i: (i, 0)),
        compiler_params=pltpu.CompilerParams(
            dimension_semantics=("parallel",)),   # shards batch tiles across v7x TCs
    )(obs, act, w1_obs, w1_act, w2, w3, b_pack)

    if padded_b != batch:
        q = q[:batch]
    # torch.squeeze(q, -1): the head width is 1, so the axis is dropped.
    if out_dim == 1:
        q = jnp.squeeze(q, -1)
    return q


# ---------------------------------------------------------------------------
# Reference (same bf16 weight casts + f32 accumulation as the kernel)
# ---------------------------------------------------------------------------
def _reference(obs, act, packed):
    w1_obs, w1_act, w2, w3, b_pack = packed
    h1_dim, h2_dim, out_dim = w1_obs.shape[1], w2.shape[1], w3.shape[1]
    cdt = w1_obs.dtype
    h1 = (jnp.dot(obs.astype(cdt), w1_obs, preferred_element_type=jnp.float32)
          + jnp.dot(act.astype(cdt), w1_act, preferred_element_type=jnp.float32)
          + b_pack[0, :h1_dim])
    h1 = jnp.maximum(h1, 0.0)
    h2 = jnp.maximum(
        jnp.dot(h1.astype(cdt), w2, preferred_element_type=jnp.float32)
        + b_pack[1, :h2_dim], 0.0)
    q = jnp.dot(h2.astype(cdt), w3, preferred_element_type=jnp.float32) \
        + b_pack[2, :out_dim]
    return jnp.squeeze(q, -1) if out_dim == 1 else q


def init_params(key, obs_dim, act_dim, hidden_sizes):
    """Synthetic parameters with nn.Linear-style shapes/init (out width = 1)."""
    sizes = [obs_dim + act_dim] + list(hidden_sizes) + [1]
    params = []
    for j in range(len(sizes) - 1):
        key, kw, kb = jax.random.split(key, 3)
        bound = 1.0 / jnp.sqrt(sizes[j])
        w = jax.random.uniform(kw, (sizes[j], sizes[j + 1]),
                               minval=-bound, maxval=bound, dtype=jnp.float32)
        b = jax.random.uniform(kb, (sizes[j + 1],),
                               minval=-bound, maxval=bound, dtype=jnp.float32)
        params.append((w, b))
    return params


if __name__ == "__main__":
    obs_dim, act_dim = 8, 4
    hidden_sizes = (32, 32)
    batch = 8

    key = jax.random.PRNGKey(0)
    key, k_obs, k_act = jax.random.split(key, 3)
    obs = jax.random.normal(k_obs, (batch, obs_dim), dtype=jnp.float32)
    act = jax.random.normal(k_act, (batch, act_dim), dtype=jnp.float32)

    params = init_params(key, obs_dim, act_dim, hidden_sizes)
    packed = pack_params(params, obs_dim, compute_dtype=jnp.bfloat16)

    # Small-batch path (single resident tile).
    q = mlp_qfunction(obs, act, packed)
    jax.block_until_ready(q)
    ref = _reference(obs, act, packed)
    assert q.shape == (batch,)
    assert jnp.allclose(q, ref, atol=2e-3, rtol=2e-3)

    # Larger batch exercises the tiled/pipelined path (grid of 512-row tiles,
    # "parallel" semantics -> sharded across TensorCores on v7x).
    big_b = 1024
    key, kb_obs, kb_act = jax.random.split(key, 3)
    obs_big = jax.random.normal(kb_obs, (big_b, obs_dim), dtype=jnp.float32)
    act_big = jax.random.normal(kb_act, (big_b, act_dim), dtype=jnp.float32)
    q_big = mlp_qfunction(obs_big, act_big, packed)
    jax.block_until_ready(q_big)
    ref_big = _reference(obs_big, act_big, packed)
    assert q_big.shape == (big_b,)
    assert jnp.allclose(q_big, ref_big, atol=2e-3, rtol=2e-3)

    # TODO(synk): if this critic is evaluated as an ensemble, add a leading
    # ensemble grid axis instead of calling this kernel per member.
    print("KERNEL_OK")
</pallas_src>

<mosaic_0001>
module attributes {stable_mosaic.version = 11 : i64} {
  func.func @_qfunc_kernel(%arg0: i32, %arg1: memref<8x8xf32, #tpu.memory_space<vmem>>, %arg2: memref<8x4xf32, #tpu.memory_space<vmem>>, %arg3: memref<8x32xbf16, #tpu.memory_space<vmem>>, %arg4: memref<4x32xbf16, #tpu.memory_space<vmem>>, %arg5: memref<32x32xbf16, #tpu.memory_space<vmem>>, %arg6: memref<32x1xbf16, #tpu.memory_space<vmem>>, %arg7: memref<3x128xf32, #tpu.memory_space<vmem>>, %arg8: memref<8x1xf32, #tpu.memory_space<vmem>>) attributes {dimension_semantics = [#tpu.dimension_semantics<parallel>], iteration_bounds = array<i64: 1>, scalar_prefetch = 0 : i64, scratch_operands = 0 : i64, tpu.core_type = #tpu.core_type<tc>, window_params = [{transform_indices = @transform_0, window_bounds = array<i64: 8, 8>}, {transform_indices = @transform_1, window_bounds = array<i64: 8, 4>}, {pipeline_mode = #tpu.pipeline_mode<synchronous>, transform_indices = @transform_2, window_bounds = array<i64: 8, 32>}, {pipeline_mode = #tpu.pipeline_mode<synchronous>, transform_indices = @transform_3, window_bounds = array<i64: 4, 32>}, {pipeline_mode = #tpu.pipeline_mode<synchronous>, transform_indices = @transform_4, window_bounds = array<i64: 32, 32>}, {pipeline_mode = #tpu.pipeline_mode<synchronous>, transform_indices = @transform_5, window_bounds = array<i64: 32, 1>}, {pipeline_mode = #tpu.pipeline_mode<synchronous>, transform_indices = @transform_6, window_bounds = array<i64: 3, 128>}, {transform_indices = @transform_7, window_bounds = array<i64: 8, 1>}]} {
    %c0 = arith.constant 0 : index
    %c0_0 = arith.constant 0 : index
    %0 = vector.load %arg7[%c0, %c0_0] : memref<3x128xf32, #tpu.memory_space<vmem>>, vector<3x128xf32>
    %1 = vector.extract_strided_slice %0 {offsets = [0, 0], sizes = [1, 32], strides = [1, 1]} : vector<3x128xf32> to vector<1x32xf32>
    %2 = vector.extract_strided_slice %0 {offsets = [1, 0], sizes = [1, 32], strides = [1, 1]} : vector<3x128xf32> to vector<1x32xf32>
    %3 = vector.extract_strided_slice %0 {offsets = [2, 0], sizes = [1, 1], strides = [1, 1]} : vector<3x128xf32> to vector<1x1xf32>
    %c0_1 = arith.constant 0 : index
    %c0_2 = arith.constant 0 : index
    %4 = vector.load %arg1[%c0_1, %c0_2] : memref<8x8xf32, #tpu.memory_space<vmem>>, vector<8x8xf32>
    %5 = arith.truncf %4 : vector<8x8xf32> to vector<8x8xbf16>
    %c0_3 = arith.constant 0 : index
    %c0_4 = arith.constant 0 : index
    %6 = vector.load %arg3[%c0_3, %c0_4] : memref<8x32xbf16, #tpu.memory_space<vmem>>, vector<8x32xbf16>
    %cst = arith.constant dense<0.000000e+00> : vector<8x32xf32>
    %7 = tpu.matmul %5, %6, %cst {dimension_numbers = #tpu.dot_dimension_numbers<[1], [0], [0], [1], [0, 0, 1, 1], [], []>} : vector<8x8xbf16>, vector<8x32xbf16>, vector<8x32xf32> -> vector<8x32xf32>
    %c0_5 = arith.constant 0 : index
    %c0_6 = arith.constant 0 : index
    %8 = vector.load %arg2[%c0_5, %c0_6] : memref<8x4xf32, #tpu.memory_space<vmem>>, vector<8x4xf32>
    %9 = arith.truncf %8 : vector<8x4xf32> to vector<8x4xbf16>
    %c0_7 = arith.constant 0 : index
    %c0_8 = arith.constant 0 : index
    %10 = vector.load %arg4[%c0_7, %c0_8] : memref<4x32xbf16, #tpu.memory_space<vmem>>, vector<4x32xbf16>
    %cst_9 = arith.constant dense<0.000000e+00> : vector<8x32xf32>
    %11 = tpu.matmul %9, %10, %cst_9 {dimension_numbers = #tpu.dot_dimension_numbers<[1], [0], [0], [1], [0, 0, 1, 1], [], []>} : vector<8x4xbf16>, vector<4x32xbf16>, vector<8x32xf32> -> vector<8x32xf32>
    %12 = arith.addf %7, %11 : vector<8x32xf32>
    %13 = vector.broadcast %1 : vector<1x32xf32> to vector<8x32xf32>
    %14 = arith.addf %12, %13 : vector<8x32xf32>
    %cst_10 = arith.constant 0.000000e+00 : f32
    %15 = vector.broadcast %cst_10 : f32 to vector<8x32xf32>
    %16 = arith.maximumf %14, %15 : vector<8x32xf32>
    %17 = arith.truncf %16 : vector<8x32xf32> to vector<8x32xbf16>
    %c0_11 = arith.constant 0 : index
    %c0_12 = arith.constant 0 : index
    %18 = vector.load %arg5[%c0_11, %c0_12] : memref<32x32xbf16, #tpu.memory_space<vmem>>, vector<32x32xbf16>
    %cst_13 = arith.constant dense<0.000000e+00> : vector<8x32xf32>
    %19 = tpu.matmul %17, %18, %cst_13 {dimension_numbers = #tpu.dot_dimension_numbers<[1], [0], [0], [1], [0, 0, 1, 1], [], []>} : vector<8x32xbf16>, vector<32x32xbf16>, vector<8x32xf32> -> vector<8x32xf32>
    %20 = vector.broadcast %2 : vector<1x32xf32> to vector<8x32xf32>
    %21 = arith.addf %19, %20 : vector<8x32xf32>
    %cst_14 = arith.constant 0.000000e+00 : f32
    %22 = vector.broadcast %cst_14 : f32 to vector<8x32xf32>
    %23 = arith.maximumf %21, %22 : vector<8x32xf32>
    %24 = arith.truncf %23 : vector<8x32xf32> to vector<8x32xbf16>
    %c0_15 = arith.constant 0 : index
    %c0_16 = arith.constant 0 : index
    %25 = vector.load %arg6[%c0_15, %c0_16] : memref<32x1xbf16, #tpu.memory_space<vmem>>, vector<32x1xbf16>
    %cst_17 = arith.constant dense<0.000000e+00> : vector<8x1xf32>
    %26 = tpu.matmul %24, %25, %cst_17 {dimension_numbers = #tpu.dot_dimension_numbers<[1], [0], [0], [1], [0, 0, 1, 1], [], []>} : vector<8x32xbf16>, vector<32x1xbf16>, vector<8x1xf32> -> vector<8x1xf32>
    %27 = vector.broadcast %3 : vector<1x1xf32> to vector<8x1xf32>
    %28 = arith.addf %26, %27 : vector<8x1xf32>
    %c0_18 = arith.constant 0 : index
    %c0_19 = arith.constant 0 : index
    %29 = vector.load %arg8[%c0_18, %c0_19] : memref<8x1xf32, #tpu.memory_space<vmem>>, vector<8x1xf32>
    tpu.vector_store %arg8[%c0_18, %c0_19], %28 {strides = array<i32>} : memref<8x1xf32, #tpu.memory_space<vmem>>, vector<8x1xf32>,
    return
  }
  func.func @transform_0(%arg0: i32) -> (i32, i32) {
    %c0_i32 = arith.constant 0 : i32
    %c0_i32_0 = arith.constant 0 : i32
    return %arg0, %c0_i32 : i32, i32
  }
  func.func @transform_1(%arg0: i32) -> (i32, i32) {
    %c0_i32 = arith.constant 0 : i32
    %c0_i32_0 = arith.constant 0 : i32
    return %arg0, %c0_i32 : i32, i32
  }
  func.func @transform_2(%arg0: i32) -> (i32, i32) {
    %c0_i32 = arith.constant 0 : i32
    %c0_i32_0 = arith.constant 0 : i32
    %c0_i32_1 = arith.constant 0 : i32
    return %c0_i32, %c0_i32_0 : i32, i32
  }
  func.func @transform_3(%arg0: i32) -> (i32, i32) {
    %c0_i32 = arith.constant 0 : i32
    %c0_i32_0 = arith.constant 0 : i32
    %c0_i32_1 = arith.constant 0 : i32
    return %c0_i32, %c0_i32_0 : i32, i32
  }
  func.func @transform_4(%arg0: i32) -> (i32, i32) {
    %c0_i32 = arith.constant 0 : i32
    %c0_i32_0 = arith.constant 0 : i32
    %c0_i32_1 = arith.constant 0 : i32
    return %c0_i32, %c0_i32_0 : i32, i32
  }
  func.func @transform_5(%arg0: i32) -> (i32, i32) {
    %c0_i32 = arith.constant 0 : i32
    %c0_i32_0 = arith.constant 0 : i32
    %c0_i32_1 = arith.constant 0 : i32
    return %c0_i32, %c0_i32_0 : i32, i32
  }
  func.func @transform_6(%arg0: i32) -> (i32, i32) {
    %c0_i32 = arith.constant 0 : i32
    %c0_i32_0 = arith.constant 0 : i32
    %c0_i32_1 = arith.constant 0 : i32
    return %c0_i32, %c0_i32_0 : i32, i32
  }
  func.func @transform_7(%arg0: i32) -> (i32, i32) {
    %c0_i32 = arith.constant 0 : i32
    %c0_i32_0 = arith.constant 0 : i32
    return %arg0, %c0_i32 : i32, i32
  }
}

</mosaic_0001>

<llo_original>
// kernel: tpu_custom_call.1
$region0: #{tpu_custom_call.1}
  #allocation0 [shape = 'u32[]', space=smem, size = 0x4, offset = 0x4, fixed_abs, tag = 'smem constant byte address 0x4 - core index']
  #allocation1 [shape = 'u32[72,128]{1,0:T(1,128)}', space=vmem, size = 0x9000, scoped, tag = 'internal scratch']
  %s0 = inlined_call_operand.vmem [shape: f32[8,8], index: 0, kind: input, shape index: {}]
  %s1 = inlined_call_operand.vmem [shape: f32[8,4], index: 1, kind: input, shape index: {}]
  %s2 = inlined_call_operand.vmem [shape: bf16[8,32], index: 2, kind: input, shape index: {}]
  %s3 = inlined_call_operand.hbm [shape: bf16[4,32], index: 3, kind: input, shape index: {}]
  %s4 = inlined_call_operand.vmem [shape: bf16[32,32], index: 4, kind: input, shape index: {}]
  %s5 = inlined_call_operand.vmem [shape: bf16[32,1], index: 5, kind: input, shape index: {}]
  %s6 = inlined_call_operand.vmem [shape: f32[3,128], index: 6, kind: input, shape index: {}]
  %s7 = inlined_call_operand.vmem [shape: f32[8,1], index: 7, kind: output, shape index: {}]
  %s8 = sld [smem:[#allocation0]]
  $region42: #{tpu_custom_call.1} parent=0
    _
  %s10 = ssub.s32 1, %s8
  %s11 = scalar_select 0, %s10, %s8
  $region1: #{tpu_custom_call.1} parent=0
    #allocation2 [shape = 'u8[1024]{0}', space=vmem, size = 0x400, scoped, tag = 'input window, operand 3, single buffered']
    #allocation3 [shape = 's32[1]{0}', space=sflag, size = 0x4, scoped, tag = 'scoped memory for tpu_custom_call.1']
    %12 = vsyncpa [#allocation3], 0
    // Predicated region
    $region2: #{tpu_custom_call.1} parent=1 // pred_check
      _
    $region3: #{tpu_custom_call.1} parent=1 // pred_check_branch
      %14 = sbr.rel (0) target = $region5
    $region4: #{tpu_custom_call.1} parent=1 // pred_region
      _
    $region5: #{tpu_custom_call.1} parent=1 // pred_fallthru
      _
    // Predicated region
    $region6: #{tpu_custom_call.1} parent=1 // pred_check
      _
    $region7: #{tpu_custom_call.1} parent=1 // pred_check_branch
      %16 = sbr.rel (0) target = $region9
    $region8: #{tpu_custom_call.1} parent=1 // pred_region
      _
    $region9: #{tpu_custom_call.1} parent=1 // pred_fallthru
      _
    // Predicated region
    $region10: #{tpu_custom_call.1} parent=1 // pred_check
      _
    $region11: #{tpu_custom_call.1} parent=1 // pred_check_branch
      %18 = sbr.rel (0) target = $region13
    $region12: #{tpu_custom_call.1} parent=1 // pred_region
      _
    $region13: #{tpu_custom_call.1} parent=1 // pred_fallthru
      _
    // Predicated region
    $region14: #{tpu_custom_call.1} parent=1 // pred_check
      _
    $region15: #{tpu_custom_call.1} parent=1 // pred_check_branch
      %20 = sbr.rel (0) target = $region17
    $region16: #{tpu_custom_call.1} parent=1 // pred_region
      %22 = vsyncadd [#allocation3], 0
      %s24 = sshll.u32 %s3, 4
      %s25 = int_to_ptr.hbm [resolvable:$true] %s24
      %s26 = sshll.u32 [#allocation2], 4
      %s27 = int_to_ptr.vmem [resolvable:$true] %s26
      %29 = dma.hbm_to_vmem [thread:$0]  %s25, 32, %s27, [#allocation3]
    $region17: #{tpu_custom_call.1} parent=1 // pred_fallthru
      _
    // Predicated region
    $region18: #{tpu_custom_call.1} parent=1 // pred_check
      _
    $region19: #{tpu_custom_call.1} parent=1 // pred_check_branch
      %31 = sbr.rel (0) target = $region21
    $region20: #{tpu_custom_call.1} parent=1 // pred_region
      _
    $region21: #{tpu_custom_call.1} parent=1 // pred_fallthru
      _
    // Predicated region
    $region22: #{tpu_custom_call.1} parent=1 // pred_check
      _
    $region23: #{tpu_custom_call.1} parent=1 // pred_check_branch
      %33 = sbr.rel (0) target = $region25
    $region24: #{tpu_custom_call.1} parent=1 // pred_region
      _
    $region25: #{tpu_custom_call.1} parent=1 // pred_fallthru
      _
    // Predicated region
    $region26: #{tpu_custom_call.1} parent=1 // pred_check
      _
    $region27: #{tpu_custom_call.1} parent=1 // pred_check_branch
      %35 = sbr.rel (0) target = $region29
    $region28: #{tpu_custom_call.1} parent=1 // pred_region
      _
    $region29: #{tpu_custom_call.1} parent=1 // pred_fallthru
      _
    // Predicated region
    $region30: #{tpu_custom_call.1} parent=1 // pred_check
      _
    $region31: #{tpu_custom_call.1} parent=1 // pred_check_branch
      %37 = sbr.rel (0) target = $region33
    $region32: #{tpu_custom_call.1} parent=1 // pred_region
      %39 = dma.done [#allocation3], 32
    $region33: #{tpu_custom_call.1} parent=1 // pred_fallthru
      _
    %v41 = vld [vmem:[%s6] sm:$0x7]
    %v42 = vld [vmem:[%s0] sm:$0xff]
    %v43 = vpack.c.bf16 %v42, %v42
    %v44 = vld [vmem:[%s2] sm:$0xf]
    %v45 = vld [vmem:[%s1] sm:$0xff]
    %v46 = vpack.c.bf16 %v45, %v45
    %v47 = vld [vmem:[#allocation2] sm:$0x3]
    %vm48 = vcmask 31744
    %v50 = vsel %vm48, %v46, 0
    %vm52 = vcmask 1041408
    %v54 = vsel %vm52, %v47, 0
    %56 = vmatpush.bf16.msra.mxu0 0
    %57 = vmatpush.bf16.msra.mxu0 0
    %58 = vmatpush.bf16.msra.mxu0 0
    %59 = vmatpush.bf16.msra.mxu0 0
    %60 = vmatpush.bf16.msra.mxu0 0
    %61 = vmatpush.bf16.msra.mxu0 0
    %62 = vmatpush.bf16.msra.mxu0 0
    %63 = vmatpush.bf16.msra.mxu0 %v54
    %64 = vmatmul.bf16.gmra.mxu0 %v50
    %v65 = vpop.f32.mrf.mxu0
    %v66 = vadd.f32 0.0, %v65
    %v67 = vpop.f32.mrf.mxu0
    %68 = vdwg.mxu0
    %vm69 = vcmask 64512
    %v71 = vsel %vm69, %v43, 0
    %vm73 = vcmask 1043456
    %v75 = vsel %vm73, %v44, 0
    %77 = vmatpush.bf16.msra.mxu0 0
    %78 = vmatpush.bf16.msra.mxu0 0
    %79 = vmatpush.bf16.msra.mxu0 0
    %80 = vmatpush.bf16.msra.mxu0 0
    %81 = vmatpush.bf16.msra.mxu0 0
    %82 = vmatpush.bf16.msra.mxu0 0
    %83 = vmatpush.bf16.msra.mxu0 0
    %84 = vmatpush.bf16.msra.mxu0 %v75
    %85 = vmatmul.bf16.gmra.mxu0 %v71
    %v86 = vpop.f32.mrf.mxu0
    %v87 = vadd.f32 %v66, %v86
    %v88 = vpop.f32.mrf.mxu0
    %89 = vdwg.mxu0
    %v90 = vperm.slane %v41, 0
    %v91 = vadd.f32 %v87, %v90
    %v92 = vmax.f32 %v91, 0.0
    %v93 = vpack.c.bf16 %v92, %v92
    %v94 = vld [vmem:[%s4] sm:$0xf]
    %v95 = vld [vmem:[%s4 + $0x4] sm:$0xf]
    %v96 = vld [vmem:[%s4 + $0x8] sm:$0xf]
    %v97 = vld [vmem:[%s4 + $0xc] sm:$0xf]
    %v98 = vperm.slane %v41, 1
    %v103 = vunpack.c.l.b16 %v94
    %v104 = vunpack.c.l.b16 %v95
    %v105 = vunpack.c.l.b16 %v96
    %v106 = vunpack.c.l.b16 %v97
    %v107 = vpack.c.b16 %v104, %v103
    %v108 = vpack.c.b16 %v106, %v105
    %vm111 = vcmask 261120
    %v113 = vsel %vm111, %v93, 0
    %115 = vmatpush.bf16.msra.mxu0 0
    %116 = vmatpush.bf16.msra.mxu0 0
    %117 = vmatpush.bf16.msra.mxu0 0
    %118 = vmatpush.bf16.msra.mxu0 0
    %119 = vmatpush.bf16.msra.mxu0 0
    %120 = vmatpush.bf16.msra.mxu0 0
    %121 = vmatpush.bf16.msra.mxu0 %v108
    %122 = vmatpush.bf16.msra.mxu0 %v107
    %123 = vmatmul.bf16.gmra.mxu0 %v113
    %v124 = vpop.f32.mrf.mxu0
    %v125 = vadd.f32 %v98, %v124
    %v126 = vpop.f32.mrf.mxu0
    %127 = vdwg.mxu0
    %v128 = vmax.f32 %v125, 0.0
    %v129 = vpack.c.bf16 %v128, %v128
    %v130 = vld [vmem:[%s5] sm:$0xf]
    %v131 = vld [vmem:[%s5 + $0x4] sm:$0xf]
    %v132 = vld [vmem:[%s5 + $0x8] sm:$0xf]
    %v133 = vld [vmem:[%s5 + $0xc] sm:$0xf]
    %v134 = vperm.slane %v41, 2
    %v139 = vunpack.c.l.b16 %v130
    %v140 = vunpack.c.l.b16 %v131
    %v141 = vunpack.c.l.b16 %v132
    %v142 = vunpack.c.l.b16 %v133
    %v143 = vpack.c.b16 %v140, %v139
    %v144 = vpack.c.b16 %v142, %v141
    %v148 = vsel %vm111, %v129, 0
    %150 = vmatpush.bf16.msra.mxu0 0
    %151 = vmatpush.bf16.msra.mxu0 0
    %152 = vmatpush.bf16.msra.mxu0 0
    %153 = vmatpush.bf16.msra.mxu0 0
    %154 = vmatpush.bf16.msra.mxu0 0
    %155 = vmatpush.bf16.msra.mxu0 0
    %156 = vmatpush.bf16.msra.mxu0 %v144
    %157 = vmatpush.bf16.msra.mxu0 %v143
    %158 = vmatmul.bf16.gmra.mxu0 %v148
    %v159 = vpop.f32.mrf.mxu0
    %v160 = vadd.f32 %v134, %v159
    %v161 = vpop.f32.mrf.mxu0
    %162 = vdwg.mxu0
    %vm163 = vcmask 7168
    %164 = vst.msk [vmem:[%s7] sm:$0xff] %vm163, %v160
    // Predicated region
    $region34: #{tpu_custom_call.1} parent=1 // pred_check
      _
    $region35: #{tpu_custom_call.1} parent=1 // pred_check_branch
      %166 = sbr.rel (0) target = $region37
    $region36: #{tpu_custom_call.1} parent=1 // pred_region
      _
    $region37: #{tpu_custom_call.1} parent=1 // pred_fallthru
      _
    // Predicated region
    $region38: #{tpu_custom_call.1} parent=1 // pred_check
      _
    $region39: #{tpu_custom_call.1} parent=1 // pred_check_branch
      %168 = sbr.rel (0) target = $region41
    $region40: #{tpu_custom_call.1} parent=1 // pred_region
      _
    $region41: #{tpu_custom_call.1} parent=1 // pred_fallthru
      _
    %169 = vsyncpa [#allocation3], 1

</llo_original>
